<compile_context>
chip_gen: v6e
topology: v6e:2x2x1
jax: 0.10.0
libtpu: 0.0.40
codegen_flags: <defaults>
</compile_context>

<pallas_src>
import jax
import jax.numpy as jnp
from jax.experimental import pallas as pl
from jax.experimental.pallas import tpu as pltpu


def _plan_tiles(r_total, C, itemsize, budget_bytes, force_split):
    """Pick the spatial-row tile (rows of 128 lanes) with honest VMEM accounting.

    Per row of 128 lanes a tile costs roughly (in VMEM):
      * logits input, native dtype, double buffered : C * itemsize * 2
      * int32 targets, double buffered              : 4 * 2
      * f32 working copies / temps (m, s, x_t, ...) : (C + 8) * 4
    """
    sub = max(8, 32 // itemsize)              # sublane granularity: f32 -> 8, bf16 -> 16
    bytes_per_row = (C * itemsize * 2 + 4 * 2 + (C + 8) * 4) * 128
    tr = max(1, budget_bytes // bytes_per_row)
    if force_split and r_total > sub:
        # N == 1: guarantee >= 2 grid steps so both v7x TensorCores get work.
        tr = min(tr, max(sub, (r_total // 2) // sub * sub))
    if tr >= r_total:
        tr = r_total                          # full extent -> always layout-legal
    else:
        tr = max(sub, tr // sub * sub)        # multiple of sublane granularity
        tr = min(tr, r_total)
    tile_bytes = bytes_per_row * tr + (8 * 128 * 4) * 2   # + double-buffered output block
    return int(tr), int(tile_bytes)


def weighted_cross_entropy(logits, targets, weights=None, *, tile_budget_bytes=4 << 20):
    """Matches torch.nn.functional.cross_entropy(logits, targets, weight=weights).

    logits:  (N, C, *spatial) float (native dtype kept in HBM; f32 cast in VMEM)
    targets: (N, *spatial) int
    weights: (C,) float, or None for unweighted CE
    """
    N, C = int(logits.shape[0]), int(logits.shape[1])
    L = 1
    for s in logits.shape[2:]:
        L *= int(s)

    # Lane-fold the spatial axis: (N, C, L) -> (N, C, R, 128). Pad L -> Lp once
    # (zeros are safe; the in-kernel mask drops them from both num and den).
    Lp = pl.cdiv(L, 128) * 128
    R = Lp // 128

    x3 = logits.reshape(N, C, L)                         # free reshape, no transpose
    t2 = targets.reshape(N, L)
    if t2.dtype != jnp.int32:
        t2 = t2.astype(jnp.int32)
    if Lp != L:
        x3 = jnp.pad(x3, ((0, 0), (0, 0), (0, Lp - L)))
        t2 = jnp.pad(t2, ((0, 0), (0, Lp - L)))
    x4 = x3.reshape(N, C, R, 128)
    t4 = t2.reshape(N, R, 128)

    if weights is None:
        w = jnp.ones((C,), jnp.float32)
    else:
        w = jnp.asarray(weights, dtype=jnp.float32).reshape(C)

    itemsize = jnp.dtype(x4.dtype).itemsize
    TR, tile_bytes = _plan_tiles(R, C, itemsize, tile_budget_bytes, force_split=(N == 1))
    num_tiles = pl.cdiv(R, TR)
    G = N * num_tiles
    vmem_limit = int(min(48 << 20, max(32 << 20, 2 * tile_bytes)))

    # TODO(synk): ignore_index / out-of-range targets are silently dropped (they
    # miss every class compare) instead of erroring like PyTorch.
    # TODO(synk): for very large C (thousands of classes) tile the class axis
    # with an online logsumexp instead of the static unroll over C.

    def kernel(x_ref, t_ref, w_ref, out_ref):
        # x_ref: (1, C, TR, 128) native dtype | t_ref: (1, TR, 128) int32
        # w_ref: (C,) f32 in SMEM             | out_ref: (1, 8, 128) f32
        t = t_ref[0]                                             # (TR, 128)

        # Running max over the tiny, statically unrolled class axis (pure VPU).
        m = x_ref[0, 0].astype(jnp.float32)
        for c in range(1, C):
            m = jnp.maximum(m, x_ref[0, c].astype(jnp.float32))

        s = jnp.zeros((TR, 128), jnp.float32)                    # exp-sum
        x_t = jnp.zeros((TR, 128), jnp.float32)                  # target logit
        w_t = jnp.zeros((TR, 128), jnp.float32)                  # target class weight
        for c in range(C):
            xc = x_ref[0, c].astype(jnp.float32)
            s = s + jnp.exp(xc - m)
            sel = t == c
            x_t = jnp.where(sel, xc, x_t)
            w_t = jnp.where(sel, w_ref[c], w_t)                  # scalar read from SMEM

        lse = m + jnp.log(s)

        # Mask the lane/row remainder of the last spatial tile (handles both the
        # L % 128 pad and a partial last block along R). Every contribution path
        # is masked, so undefined tail data (even inf/NaN) never reaches the sums.
        row = jax.lax.broadcasted_iota(jnp.int32, (TR, 128), 0)
        lane = jax.lax.broadcasted_iota(jnp.int32, (TR, 128), 1)
        pos = pl.program_id(1) * (TR * 128) + row * 128 + lane
        valid = pos < L
        w_t = jnp.where(valid, w_t, 0.0)
        contrib = jnp.where(valid, w_t * (lse - x_t), 0.0)

        num = jnp.sum(contrib)                                   # weighted-NLL partial
        den = jnp.sum(w_t)                                       # weight partial

        # Single merged output block: num in sublane 0, den in sublane 1.
        rid = jax.lax.broadcasted_iota(jnp.int32, (8, 128), 0)
        out_ref[0] = jnp.where(rid == 0, num, jnp.where(rid == 1, den, 0.0))

    part = pl.pallas_call(
        kernel,
        out_shape=jax.ShapeDtypeStruct((G, 8, 128), jnp.float32),
        grid_spec=pltpu.PrefetchScalarGridSpec(
            num_scalar_prefetch=0,
            grid=(N, num_tiles),
            in_specs=[
                pl.BlockSpec((1, C, TR, 128), lambda n, ti: (n, 0, ti, 0)),   # logits tile
                pl.BlockSpec((1, TR, 128), lambda n, ti: (n, ti, 0)),         # targets tile
                pl.BlockSpec(memory_space=pltpu.MemorySpace.SMEM),            # class weights
            ],
            out_specs=pl.BlockSpec((1, 8, 128),
                                   lambda n, ti: (n * num_tiles + ti, 0, 0)),
        ),
        compiler_params=pltpu.CompilerParams(
            dimension_semantics=("parallel", "parallel"),
            vmem_limit_bytes=vmem_limit),
    )(x4, t4, w)

    num_total = jnp.sum(part[:, 0, 0])
    den_total = jnp.sum(part[:, 1, 0])
    return num_total / den_total


def _reference(logits, targets, weights):
    """Pure-JAX reference matching torch.nn.functional.cross_entropy."""
    C = logits.shape[1]
    x = jnp.moveaxis(logits, 1, -1).reshape(-1, C).astype(jnp.float32)
    t = targets.reshape(-1)
    logp = jax.nn.log_softmax(x, axis=-1)
    nll = -jnp.take_along_axis(logp, t[:, None], axis=-1)[:, 0]
    w_t = jnp.asarray(weights, jnp.float32)[t]
    return jnp.sum(w_t * nll) / jnp.sum(w_t)


if __name__ == "__main__":
    key = jax.random.PRNGKey(0)
    k1, k2, k3, k4, k5, k6 = jax.random.split(key, 6)

    # Case 1: typical NCHW segmentation-style input for this module.
    N, C, H, W = 2, 4, 16, 16
    logits = jax.random.normal(k1, (N, C, H, W), dtype=jnp.float32)
    targets = jax.random.randint(k2, (N, H, W), 0, C, dtype=jnp.int32)
    class_weights = jnp.array([1.0, 2.0, 0.5, 1.5], dtype=jnp.float32)
    loss = jax.block_until_ready(weighted_cross_entropy(logits, targets, class_weights))
    ref = _reference(logits, targets, class_weights)
    assert jnp.allclose(loss, ref, rtol=1e-5, atol=1e-5), (loss, ref)

    # Case 2: bf16 logits, spatial size not a multiple of 128, tiny tile budget
    # (exercises native-dtype DMA, lane-fold padding, multi-tile grid, and the
    # in-kernel remainder mask on a partial last block).
    N2, C2, H2, W2 = 2, 5, 33, 65
    logits2 = jax.random.normal(k3, (N2, C2, H2, W2), dtype=jnp.bfloat16)
    targets2 = jax.random.randint(k4, (N2, H2, W2), 0, C2, dtype=jnp.int32)
    weights2 = jnp.array([1.0, 0.5, 2.0, 1.5, 0.25], dtype=jnp.float32)
    loss2 = jax.block_until_ready(
        weighted_cross_entropy(logits2, targets2, weights2, tile_budget_bytes=64 * 1024))
    ref2 = _reference(logits2, targets2, weights2)
    assert jnp.allclose(loss2, ref2, rtol=1e-4, atol=1e-4), (loss2, ref2)

    # Case 3: N == 1 and weights=None — the planner force-splits the spatial axis
    # into >= 2 parallel tiles so both v7x TensorCores get grid work.
    N3, C3, H3, W3 = 1, 3, 48, 48
    logits3 = jax.random.normal(k5, (N3, C3, H3, W3), dtype=jnp.float32)
    targets3 = jax.random.randint(k6, (N3, H3, W3), 0, C3, dtype=jnp.int32)
    loss3 = jax.block_until_ready(weighted_cross_entropy(logits3, targets3, None))
    ref3 = _reference(logits3, targets3, jnp.ones((C3,), jnp.float32))
    assert jnp.allclose(loss3, ref3, rtol=1e-5, atol=1e-5), (loss3, ref3)

    print("KERNEL_OK")
</pallas_src>

<mosaic_0001>
module attributes {stable_mosaic.version = 11 : i64} {
  func.func @kernel(%arg0: i32, %arg1: i32, %arg2: memref<1x4x2x128xf32, #tpu.memory_space<vmem>>, %arg3: memref<1x2x128xi32, #tpu.memory_space<vmem>>, %arg4: memref<4xf32, #tpu.memory_space<smem>>, %arg5: memref<1x8x128xf32, #tpu.memory_space<vmem>>) attributes {dimension_semantics = [#tpu.dimension_semantics<parallel>, #tpu.dimension_semantics<parallel>], iteration_bounds = array<i64: 2, 1>, scalar_prefetch = 0 : i64, scratch_operands = 0 : i64, tpu.core_type = #tpu.core_type<tc>, window_params = [{transform_indices = @transform_0, window_bounds = array<i64: 1, 4, 2, 128>}, {transform_indices = @transform_1, window_bounds = array<i64: 1, 2, 128>}, {transform_indices = @transform_2, window_bounds = array<i64: 4>}, {transform_indices = @transform_3, window_bounds = array<i64: 1, 8, 128>}]} {
    %c0 = arith.constant 0 : index
    %c0_0 = arith.constant 0 : index
    %c0_1 = arith.constant 0 : index
    %0 = vector.load %arg3[%c0, %c0_0, %c0_1] : memref<1x2x128xi32, #tpu.memory_space<vmem>>, vector<1x2x128xi32>
    %1 = vector.shape_cast %0 : vector<1x2x128xi32> to vector<2x128xi32>
    %c0_2 = arith.constant 0 : index
    %c0_3 = arith.constant 0 : index
    %c0_4 = arith.constant 0 : index
    %c0_5 = arith.constant 0 : index
    %2 = vector.load %arg2[%c0_2, %c0_3, %c0_4, %c0_5] : memref<1x4x2x128xf32, #tpu.memory_space<vmem>>, vector<1x1x2x128xf32>
    %3 = vector.shape_cast %2 : vector<1x1x2x128xf32> to vector<2x128xf32>
    %c0_6 = arith.constant 0 : index
    %c1 = arith.constant 1 : index
    %c0_7 = arith.constant 0 : index
    %c0_8 = arith.constant 0 : index
    %4 = vector.load %arg2[%c0_6, %c1, %c0_7, %c0_8] : memref<1x4x2x128xf32, #tpu.memory_space<vmem>>, vector<1x1x2x128xf32>
    %5 = vector.shape_cast %4 : vector<1x1x2x128xf32> to vector<2x128xf32>
    %6 = arith.maximumf %3, %5 : vector<2x128xf32>
    %c0_9 = arith.constant 0 : index
    %c2 = arith.constant 2 : index
    %c0_10 = arith.constant 0 : index
    %c0_11 = arith.constant 0 : index
    %7 = vector.load %arg2[%c0_9, %c2, %c0_10, %c0_11] : memref<1x4x2x128xf32, #tpu.memory_space<vmem>>, vector<1x1x2x128xf32>
    %8 = vector.shape_cast %7 : vector<1x1x2x128xf32> to vector<2x128xf32>
    %9 = arith.maximumf %6, %8 : vector<2x128xf32>
    %c0_12 = arith.constant 0 : index
    %c3 = arith.constant 3 : index
    %c0_13 = arith.constant 0 : index
    %c0_14 = arith.constant 0 : index
    %10 = vector.load %arg2[%c0_12, %c3, %c0_13, %c0_14] : memref<1x4x2x128xf32, #tpu.memory_space<vmem>>, vector<1x1x2x128xf32>
    %11 = vector.shape_cast %10 : vector<1x1x2x128xf32> to vector<2x128xf32>
    %12 = arith.maximumf %9, %11 : vector<2x128xf32>
    %cst = arith.constant 0.000000e+00 : f32
    %13 = vector.broadcast %cst : f32 to vector<2x128xf32>
    %cst_15 = arith.constant 0.000000e+00 : f32
    %14 = vector.broadcast %cst_15 : f32 to vector<2x128xf32>
    %cst_16 = arith.constant 0.000000e+00 : f32
    %15 = vector.broadcast %cst_16 : f32 to vector<2x128xf32>
    %c0_17 = arith.constant 0 : index
    %c0_18 = arith.constant 0 : index
    %c0_19 = arith.constant 0 : index
    %c0_20 = arith.constant 0 : index
    %16 = vector.load %arg2[%c0_17, %c0_18, %c0_19, %c0_20] : memref<1x4x2x128xf32, #tpu.memory_space<vmem>>, vector<1x1x2x128xf32>
    %17 = vector.shape_cast %16 : vector<1x1x2x128xf32> to vector<2x128xf32>
    %18 = arith.subf %17, %12 : vector<2x128xf32>
    %19 = math.exp %18 : vector<2x128xf32>
    %20 = arith.addf %13, %19 : vector<2x128xf32>
    %c0_i32 = arith.constant 0 : i32
    %21 = vector.broadcast %c0_i32 : i32 to vector<2x128xi32>
    %22 = arith.cmpi eq, %1, %21 : vector<2x128xi32>
    %23 = arith.select %22, %17, %14 : vector<2x128xi1>, vector<2x128xf32>
    %c0_21 = arith.constant 0 : index
    %24 = memref.load %arg4[%c0_21] : memref<4xf32, #tpu.memory_space<smem>>
    %25 = vector.broadcast %24 : f32 to vector<2x128xf32>
    %26 = arith.select %22, %25, %15 : vector<2x128xi1>, vector<2x128xf32>
    %c0_22 = arith.constant 0 : index
    %c1_23 = arith.constant 1 : index
    %c0_24 = arith.constant 0 : index
    %c0_25 = arith.constant 0 : index
    %27 = vector.load %arg2[%c0_22, %c1_23, %c0_24, %c0_25] : memref<1x4x2x128xf32, #tpu.memory_space<vmem>>, vector<1x1x2x128xf32>
    %28 = vector.shape_cast %27 : vector<1x1x2x128xf32> to vector<2x128xf32>
    %29 = arith.subf %28, %12 : vector<2x128xf32>
    %30 = math.exp %29 : vector<2x128xf32>
    %31 = arith.addf %20, %30 : vector<2x128xf32>
    %c1_i32 = arith.constant 1 : i32
    %32 = vector.broadcast %c1_i32 : i32 to vector<2x128xi32>
    %33 = arith.cmpi eq, %1, %32 : vector<2x128xi32>
    %34 = arith.select %33, %28, %23 : vector<2x128xi1>, vector<2x128xf32>
    %c1_26 = arith.constant 1 : index
    %35 = memref.load %arg4[%c1_26] : memref<4xf32, #tpu.memory_space<smem>>
    %36 = vector.broadcast %35 : f32 to vector<2x128xf32>
    %37 = arith.select %33, %36, %26 : vector<2x128xi1>, vector<2x128xf32>
    %c0_27 = arith.constant 0 : index
    %c2_28 = arith.constant 2 : index
    %c0_29 = arith.constant 0 : index
    %c0_30 = arith.constant 0 : index
    %38 = vector.load %arg2[%c0_27, %c2_28, %c0_29, %c0_30] : memref<1x4x2x128xf32, #tpu.memory_space<vmem>>, vector<1x1x2x128xf32>
    %39 = vector.shape_cast %38 : vector<1x1x2x128xf32> to vector<2x128xf32>
    %40 = arith.subf %39, %12 : vector<2x128xf32>
    %41 = math.exp %40 : vector<2x128xf32>
    %42 = arith.addf %31, %41 : vector<2x128xf32>
    %c2_i32 = arith.constant 2 : i32
    %43 = vector.broadcast %c2_i32 : i32 to vector<2x128xi32>
    %44 = arith.cmpi eq, %1, %43 : vector<2x128xi32>
    %45 = arith.select %44, %39, %34 : vector<2x128xi1>, vector<2x128xf32>
    %c2_31 = arith.constant 2 : index
    %46 = memref.load %arg4[%c2_31] : memref<4xf32, #tpu.memory_space<smem>>
    %47 = vector.broadcast %46 : f32 to vector<2x128xf32>
    %48 = arith.select %44, %47, %37 : vector<2x128xi1>, vector<2x128xf32>
    %c0_32 = arith.constant 0 : index
    %c3_33 = arith.constant 3 : index
    %c0_34 = arith.constant 0 : index
    %c0_35 = arith.constant 0 : index
    %49 = vector.load %arg2[%c0_32, %c3_33, %c0_34, %c0_35] : memref<1x4x2x128xf32, #tpu.memory_space<vmem>>, vector<1x1x2x128xf32>
    %50 = vector.shape_cast %49 : vector<1x1x2x128xf32> to vector<2x128xf32>
    %51 = arith.subf %50, %12 : vector<2x128xf32>
    %52 = math.exp %51 : vector<2x128xf32>
    %53 = arith.addf %42, %52 : vector<2x128xf32>
    %c3_i32 = arith.constant 3 : i32
    %54 = vector.broadcast %c3_i32 : i32 to vector<2x128xi32>
    %55 = arith.cmpi eq, %1, %54 : vector<2x128xi32>
    %56 = arith.select %55, %50, %45 : vector<2x128xi1>, vector<2x128xf32>
    %c3_36 = arith.constant 3 : index
    %57 = memref.load %arg4[%c3_36] : memref<4xf32, #tpu.memory_space<smem>>
    %58 = vector.broadcast %57 : f32 to vector<2x128xf32>
    %59 = arith.select %55, %58, %48 : vector<2x128xi1>, vector<2x128xf32>
    %60 = math.log %53 : vector<2x128xf32>
    %61 = arith.addf %12, %60 : vector<2x128xf32>
    %62 = tpu.iota {dimensions = array<i32: 0>} : vector<2x128xi32>
    %63 = tpu.iota {dimensions = array<i32: 1>} : vector<2x128xi32>
    %c256_i32 = arith.constant 256 : i32
    %64 = arith.muli %arg1, %c256_i32 : i32
    %c128_i32 = arith.constant 128 : i32
    %65 = vector.broadcast %c128_i32 : i32 to vector<2x128xi32>
    %66 = arith.muli %62, %65 : vector<2x128xi32>
    %67 = vector.broadcast %64 : i32 to vector<2x128xi32>
    %68 = arith.addi %67, %66 : vector<2x128xi32>
    %69 = arith.addi %68, %63 : vector<2x128xi32>
    %c256_i32_37 = arith.constant 256 : i32
    %70 = vector.broadcast %c256_i32_37 : i32 to vector<2x128xi32>
    %71 = arith.cmpi slt, %69, %70 : vector<2x128xi32>
    %cst_38 = arith.constant 0.000000e+00 : f32
    %72 = vector.broadcast %cst_38 : f32 to vector<2x128xf32>
    %73 = arith.select %71, %59, %72 : vector<2x128xi1>, vector<2x128xf32>
    %74 = arith.subf %61, %56 : vector<2x128xf32>
    %75 = arith.mulf %73, %74 : vector<2x128xf32>
    %cst_39 = arith.constant 0.000000e+00 : f32
    %76 = vector.broadcast %cst_39 : f32 to vector<2x128xf32>
    %77 = arith.select %71, %75, %76 : vector<2x128xi1>, vector<2x128xf32>
    %78 = vector.shape_cast %77 : vector<2x128xf32> to vector<1x2x128xf32>
    %cst_40 = arith.constant dense<0.000000e+00> : vector<1xf32>
    %79 = vector.multi_reduction <add>, %78, %cst_40 [1, 2] : vector<1x2x128xf32> to vector<1xf32>
    %80 = vector.shape_cast %79 : vector<1xf32> to vector<1x1x1xf32>
    %81 = vector.extract %80[0, 0, 0] : f32 from vector<1x1x1xf32>
    %82 = vector.shape_cast %73 : vector<2x128xf32> to vector<1x2x128xf32>
    %cst_41 = arith.constant dense<0.000000e+00> : vector<1xf32>
    %83 = vector.multi_reduction <add>, %82, %cst_41 [1, 2] : vector<1x2x128xf32> to vector<1xf32>
    %84 = vector.shape_cast %83 : vector<1xf32> to vector<1x1x1xf32>
    %85 = vector.extract %84[0, 0, 0] : f32 from vector<1x1x1xf32>
    %86 = tpu.iota {dimensions = array<i32: 0>} : vector<8x128xi32>
    %c0_i32_42 = arith.constant 0 : i32
    %87 = vector.broadcast %c0_i32_42 : i32 to vector<8x128xi32>
    %88 = arith.cmpi eq, %86, %87 : vector<8x128xi32>
    %c1_i32_43 = arith.constant 1 : i32
    %89 = vector.broadcast %c1_i32_43 : i32 to vector<8x128xi32>
    %90 = arith.cmpi eq, %86, %89 : vector<8x128xi32>
    %cst_44 = arith.constant 0.000000e+00 : f32
    %91 = vector.broadcast %85 : f32 to vector<8x128xf32>
    %92 = vector.broadcast %cst_44 : f32 to vector<8x128xf32>
    %93 = arith.select %90, %91, %92 : vector<8x128xi1>, vector<8x128xf32>
    %94 = vector.broadcast %81 : f32 to vector<8x128xf32>
    %95 = arith.select %88, %94, %93 : vector<8x128xi1>, vector<8x128xf32>
    %c0_45 = arith.constant 0 : index
    %c0_46 = arith.constant 0 : index
    %c0_47 = arith.constant 0 : index
    %96 = vector.load %arg5[%c0_45, %c0_46, %c0_47] : memref<1x8x128xf32, #tpu.memory_space<vmem>>, vector<1x8x128xf32>
    %97 = vector.shape_cast %96 : vector<1x8x128xf32> to vector<8x128xf32>
    %98 = vector.shape_cast %95 : vector<8x128xf32> to vector<1x8x128xf32>
    tpu.vector_store %arg5[%c0_45, %c0_46, %c0_47], %98 {strides = array<i32>} : memref<1x8x128xf32, #tpu.memory_space<vmem>>, vector<1x8x128xf32>,
    return
  }
  func.func @transform_0(%arg0: i32, %arg1: i32) -> (i32, i32, i32, i32) {
    %c0_i32 = arith.constant 0 : i32
    %c0_i32_0 = arith.constant 0 : i32
    %c0_i32_1 = arith.constant 0 : i32
    return %arg0, %c0_i32, %arg1, %c0_i32_0 : i32, i32, i32, i32
  }
  func.func @transform_1(%arg0: i32, %arg1: i32) -> (i32, i32, i32) {
    %c0_i32 = arith.constant 0 : i32
    %c0_i32_0 = arith.constant 0 : i32
    return %arg0, %arg1, %c0_i32 : i32, i32, i32
  }
  func.func @transform_2(%arg0: i32, %arg1: i32) -> i32 {
    %c0_i32 = arith.constant 0 : i32
    %c0_i32_0 = arith.constant 0 : i32
    return %c0_i32 : i32
  }
  func.func @transform_3(%arg0: i32, %arg1: i32) -> (i32, i32, i32) {
    %c1_i32 = arith.constant 1 : i32
    %0 = arith.muli %arg0, %c1_i32 : i32
    %1 = arith.addi %0, %arg1 : i32
    %c0_i32 = arith.constant 0 : i32
    %c0_i32_0 = arith.constant 0 : i32
    %c0_i32_1 = arith.constant 0 : i32
    return %1, %c0_i32, %c0_i32_0 : i32, i32, i32
  }
}

</mosaic_0001>

<llo_original>
// kernel: tpu_custom_call.1
$region0: #{tpu_custom_call.1}
  #allocation0 [shape = 'u32[]', space=smem, size = 0x4, offset = 0x4, fixed_abs, tag = 'smem constant byte address 0x4 - core index']
  #allocation1 [shape = 'u32[144,128]{1,0:T(1,128)}', space=vmem, size = 0x12000, scoped, tag = 'internal scratch']
  %s0 = inlined_call_operand.hbm [shape: f32[2,4,2,128], index: 0, kind: input, shape index: {}]
  %s1 = inlined_call_operand.hbm [shape: s32[2,2,128], index: 1, kind: input, shape index: {}]
  %s2 = inlined_call_operand.vmem [shape: f32[4], index: 2, kind: input, shape index: {}]
  %s3 = inlined_call_operand.hbm [shape: f32[2,8,128], index: 3, kind: output, shape index: {}]
  %s4 = sld [smem:[#allocation0]]
  $region57: #{tpu_custom_call.1} parent=0
    _
  %s6 = ssub.s32 1, %s4
  %s7 = scalar_select 0, %s6, %s4
  $region1: #{tpu_custom_call.1} parent=0
    #allocation2 [shape = 'u8[8192]{0}', space=vmem, size = 0x2000, scoped, tag = 'input window, operand 0']
    #allocation3 [shape = 's32[2]{0}', space=sflag, size = 0x8, scoped, tag = 'scoped memory for tpu_custom_call.1']
    #allocation4 [shape = 's32[2]{0}', space=sflag, size = 0x8, scoped, tag = 'scoped memory for tpu_custom_call.1']
    #allocation5 [shape = 's32[2]{0}', space=sflag, size = 0x8, scoped, tag = 'scoped memory for tpu_custom_call.1']
    #allocation6 [shape = 'u8[2048]{0}', space=vmem, size = 0x800, scoped, tag = 'input window, operand 1']
    #allocation7 [shape = 's32[2]{0}', space=sflag, size = 0x8, scoped, tag = 'scoped memory for tpu_custom_call.1']
    #allocation8 [shape = 'u8[512]{0}', space=smem, size = 0x200, scoped, tag = 'input window, operand 2, single buffered']
    #allocation9 [shape = 'u8[8192]{0}', space=vmem, size = 0x2000, scoped, tag = 'output window, operand 0']
    %8 = vsyncpa [#allocation3], 0
    %s9 = scalar_lea.sflag [#allocation3], 1
    %10 = vsyncpa %s9, 0
    %11 = vsyncpa [#allocation7], 0
    %s12 = scalar_lea.sflag [#allocation7], 1
    %13 = vsyncpa %s12, 0
    %14 = vsyncpa [#allocation5], 0
    %15 = vsyncpa [#allocation4], 0
    %s16 = scalar_lea.sflag [#allocation4], 1
    %17 = vsyncpa %s16, 0
    loop: start=0, step=1, limit=4
    $region2: #{tpu_custom_call.1} parent=1 // loop_pre_header
      _
    $region3: #{tpu_custom_call.1} parent=1 // loop_header
      %s19 = sphi 0, %s23
      %p20 = scmp.ge.s32.totalorder %s19, 4
      %s26 = sphi 0, %s38
      %s27 = sphi 0, %s34
      %s28 = sphi 0, %s26
      %s29 = sphi 0, %s27
      %s30 = sphi 0, %s28
      %s31 = sphi 0, %s29
      %s43 = sphi 0, %s45
      %s46 = sphi 0, %s43
      %s47 = sphi 0, %s46
      %s63 = sphi 0, %s47
      %s71 = sphi 0, %s73
      %s74 = sphi 0, %s71
      %s75 = sphi 0, %s74
      %s91 = sphi 0, %s75
      %s95 = sphi 0, %s95
      %s97 = sphi 0, %s95
      %s98 = sphi 0, %s97
      %s112 = sphi 0, %s98
      %s120 = sphi 0, %s122
      %s123 = sphi 0, %s120
      %s124 = sphi 0, %s123
      %s140 = sphi 0, %s124
    $region4: #{tpu_custom_call.1} parent=1 // loop_header_branch
      %22 = sbr.rel (%p20) target = $region8
    $region5: #{tpu_custom_call.1} parent=1 // loop_body
      %s24 = ssub.s32 %s19, 1
      %s25 = ssub.s32 %s19, 2
      %s32 = sadd.s32 1, %s27
      %p33 = scmp.ge.s32.totalorder %s32, 1
      %s34 = scalar_select %p33, 0, %s32
      %s35 = sadd.s32 1, %s26
      %s36 = scalar_select %p33, %s35, %s26
      %p37 = scmp.ge.s32.totalorder %s36, 2
      %s38 = scalar_select %p37, 0, %s36
      %s39 = ssub.s32 %s26, %s38
      %s40 = ssub.s32 %s27, %s34
      %s41 = sor.u32 %s39, %s40
      %p42 = scmp.eq.s32.totalorder %s41, 0
      %s44 = sadd.s32 %s43, 1
      %s45 = scalar_select %p42, %s43, %s44
      %p48 = pneg %p42
      %p49 = scmp.eq.s32.totalorder %s19, 1
      %p50 = por %p48, %p49
      %p51 = scmp.ne.s32.totalorder %s43, %s46
      %p52 = scmp.eq.s32.totalorder %s19, 0
      %p53 = por %p51, %p52
      %p54 = scmp.ne.s32.totalorder %s43, %s46
      %p55 = scmp.eq.s32.totalorder %s24, 1
      %p56 = por %p54, %p55
      %p57 = scmp.ne.s32.totalorder %s46, %s47
      %p58 = scmp.eq.s32.totalorder %s24, 0
      %p59 = por %p57, %p58
      %p60 = scmp.ne.s32.totalorder %s46, %s47
      %p61 = scmp.eq.s32.totalorder %s25, 1
      %p62 = por %p60, %p61
      %p64 = scmp.ne.s32.totalorder %s47, %s63
      %p65 = scmp.eq.s32.totalorder %s25, 0
      %p66 = por %p64, %p65
      %s67 = ssub.s32 %s26, %s38
      %s68 = ssub.s32 %s27, %s34
      %s69 = sor.u32 %s67, %s68
      %p70 = scmp.eq.s32.totalorder %s69, 0
      %s72 = sadd.s32 %s71, 1
      %s73 = scalar_select %p70, %s71, %s72
      %p76 = pneg %p70
      %p77 = scmp.eq.s32.totalorder %s19, 1
      %p78 = por %p76, %p77
      %p79 = scmp.ne.s32.totalorder %s71, %s74
      %p80 = scmp.eq.s32.totalorder %s19, 0
      %p81 = por %p79, %p80
      %p82 = scmp.ne.s32.totalorder %s71, %s74
      %p83 = scmp.eq.s32.totalorder %s24, 1
      %p84 = por %p82, %p83
      %p85 = scmp.ne.s32.totalorder %s74, %s75
      %p86 = scmp.eq.s32.totalorder %s24, 0
      %p87 = por %p85, %p86
      %p88 = scmp.ne.s32.totalorder %s74, %s75
      %p89 = scmp.eq.s32.totalorder %s25, 1
      %p90 = por %p88, %p89
      %p92 = scmp.ne.s32.totalorder %s75, %s91
      %p93 = scmp.eq.s32.totalorder %s25, 0
      %p94 = por %p92, %p93
      %s96 = sadd.s32 %s95, 1
      %p99 = scmp.eq.s32.totalorder %s19, 1
      %p100 = scmp.ne.s32.totalorder %s95, %s97
      %p101 = scmp.eq.s32.totalorder %s19, 0
      %p102 = por %p100, %p101
      %p103 = scmp.ne.s32.totalorder %s95, %s97
      %p104 = scmp.eq.s32.totalorder %s24, 1
      %p105 = por %p103, %p104
      %p106 = scmp.ne.s32.totalorder %s97, %s98
      %p107 = scmp.eq.s32.totalorder %s24, 0
      %p108 = por %p106, %p107
      %p109 = scmp.ne.s32.totalorder %s97, %s98
      %p110 = scmp.eq.s32.totalorder %s25, 1
      %p111 = por %p109, %p110
      %p113 = scmp.ne.s32.totalorder %s98, %s112
      %p114 = scmp.eq.s32.totalorder %s25, 0
      %p115 = por %p113, %p114
      %s116 = sadd.s32 %s26, %s27
      %s117 = sadd.s32 %s38, %s34
      %s118 = ssub.s32 %s116, %s117
      %p119 = scmp.eq.s32.totalorder %s118, 0
      %s121 = sadd.s32 %s120, 1
      %s122 = scalar_select %p119, %s120, %s121
      %p125 = pneg %p119
      %p126 = scmp.eq.s32.totalorder %s19, 1
      %p127 = por %p125, %p126
      %p128 = scmp.ne.s32.totalorder %s120, %s123
      %p129 = scmp.eq.s32.totalorder %s19, 0
      %p130 = por %p128, %p129
      %p131 = scmp.ne.s32.totalorder %s120, %s123
      %p132 = scmp.eq.s32.totalorder %s24, 1
      %p133 = por %p131, %p132
      %p134 = scmp.ne.s32.totalorder %s123, %s124
      %p135 = scmp.eq.s32.totalorder %s24, 0
      %p136 = por %p134, %p135
      %p137 = scmp.ne.s32.totalorder %s123, %s124
      %p138 = scmp.eq.s32.totalorder %s25, 1
      %p139 = por %p137, %p138
      %p141 = scmp.ne.s32.totalorder %s124, %s140
      %p142 = scmp.eq.s32.totalorder %s25, 0
      %p143 = por %p141, %p142
      %p144 = scmp.le.s32.totalorder 1, %s19
      %p145 = scmp.lt.s32.totalorder %s19, 3
      %p146 = pnand %p144, %p145
      %p147 = pneg %p146
      // Predicated region
      $region9: #{tpu_custom_call.1} parent=5 // pred_check
        _
      $region10: #{tpu_custom_call.1} parent=5 // pred_check_branch
        %149 = sbr.rel (%p146) target = $region12
      $region11: #{tpu_custom_call.1} parent=5 // pred_region
        %s150 = ssub.s32 %s19, 1
        // Predicated region
        $region13: #{tpu_custom_call.1} parent=11 // pred_check
          %p151 = pneg %p108
        $region14: #{tpu_custom_call.1} parent=11 // pred_check_branch
          %153 = sbr.rel (%p151) target = $region16
        $region15: #{tpu_custom_call.1} parent=11 // pred_region
          %s155 = ssub.s32 16, 16
          %156 = vsyncadd [#allocation5], %s155
          %s158 = sshll.u32 %s2, 4
          %s159 = int_to_ptr.vmem [resolvable:$true] %s158
          %161 = dma.vmem_to_smem %s159, 16, [#allocation8], [#allocation5]
        $region16: #{tpu_custom_call.1} parent=11 // pred_fallthru
          _
      $region12: #{tpu_custom_call.1} parent=5 // pred_fallthru
        _
      %p162 = scmp.lt.s32.totalorder %s19, 2
      // Predicated region
      $region17: #{tpu_custom_call.1} parent=5 // pred_check
        %p163 = pneg %p162
      $region18: #{tpu_custom_call.1} parent=5 // pred_check_branch
        %165 = sbr.rel (%p163) target = $region20
      $region19: #{tpu_custom_call.1} parent=5 // pred_region
        // Predicated region
        $region21: #{tpu_custom_call.1} parent=19 // pred_check
          %p166 = pneg %p53
        $region22: #{tpu_custom_call.1} parent=19 // pred_check_branch
          %168 = sbr.rel (%p166) target = $region24
        $region23: #{tpu_custom_call.1} parent=19 // pred_region
          %s169 = sand.u32 %s43, 1
          %s170 = scalar_lea.sflag [#allocation3], %s169
          %s171 = sand.u32 %s43, 1
          %s172 = smul.addr %s171, 8
          %s173 = scalar_lea.vmem [#allocation2], %s172
          %s175 = ssub.s32 128, 128
          %176 = vsyncadd %s170, %s175
          %s177 = smul.addr %s26, 4
          %s178 = sadd.s32 %s27, %s177
          %s179 = smul.addr %s178, 32
          %s180 = scalar_lea.hbm %s0, %s179
          %s181 = sshll.u32 %s173, 4
          %s182 = int_to_ptr.vmem [resolvable:$true] %s181
          %187 = dma.hbm_to_vmem [thread:$0]  %s180, 128, %s182, %s170, 32, 32, 2
        $region24: #{tpu_custom_call.1} parent=19 // pred_fallthru
          _
        // Predicated region
        $region25: #{tpu_custom_call.1} parent=19 // pred_check
          %p188 = pneg %p81
        $region26: #{tpu_custom_call.1} parent=19 // pred_check_branch
          %190 = sbr.rel (%p188) target = $region28
        $region27: #{tpu_custom_call.1} parent=19 // pred_region
          %s191 = sand.u32 %s71, 1
          %s192 = scalar_lea.sflag [#allocation7], %s191
          %s193 = sand.u32 %s71, 1
          %s194 = smul.addr %s193, 2
          %s195 = scalar_lea.vmem [#allocation6], %s194
          %s197 = ssub.s32 32, 32
          %198 = vsyncadd %s192, %s197
          %s199 = sadd.s32 %s27, %s26
          %s200 = smul.addr %s199, 32
          %s201 = scalar_lea.hbm %s1, %s200
          %s203 = sshll.u32 %s195, 4
          %s204 = int_to_ptr.vmem [resolvable:$true] %s203
          %206 = dma.hbm_to_vmem [thread:$0]  %s201, 32, %s204, %s192
        $region28: #{tpu_custom_call.1} parent=19 // pred_fallthru
          _
      $region20: #{tpu_custom_call.1} parent=5 // pred_fallthru
        _
      %p207 = scmp.le.s32.totalorder 1, %s19
      %p208 = scmp.lt.s32.totalorder %s19, 3
      %p209 = pnand %p207, %p208
      %p210 = pneg %p209
      // Predicated region
      $region29: #{tpu_custom_call.1} parent=5 // pred_check
        _
      $region30: #{tpu_custom_call.1} parent=5 // pred_check_branch
        %212 = sbr.rel (%p209) target = $region32
      $region31: #{tpu_custom_call.1} parent=5 // pred_region
        %s213 = ssub.s32 %s19, 1
        %s214 = sand.u32 %s46, 1
        %s215 = scalar_lea.sflag [#allocation3], %s214
        %s216 = sand.u32 %s46, 1
        %s217 = smul.addr %s216, 8
        %s218 = scalar_lea.vmem [#allocation2], %s217
        // Predicated region
        $region33: #{tpu_custom_call.1} parent=31 // pred_check
          %p219 = pneg %p59
        $region34: #{tpu_custom_call.1} parent=31 // pred_check_branch
          %221 = sbr.rel (%p219) target = $region36
        $region35: #{tpu_custom_call.1} parent=31 // pred_region
          %222 = dma.done %s215, 128
        $region36: #{tpu_custom_call.1} parent=31 // pred_fallthru
          _
        %s223 = sand.u32 %s74, 1
        %s224 = scalar_lea.sflag [#allocation7], %s223
        %s225 = sand.u32 %s74, 1
        %s226 = smul.addr %s225, 2
        %s227 = scalar_lea.vmem [#allocation6], %s226
        // Predicated region
        $region37: #{tpu_custom_call.1} parent=31 // pred_check
          %p228 = pneg %p87
        $region38: #{tpu_custom_call.1} parent=31 // pred_check_branch
          %230 = sbr.rel (%p228) target = $region40
        $region39: #{tpu_custom_call.1} parent=31 // pred_region
          %231 = dma.done %s224, 32
        $region40: #{tpu_custom_call.1} parent=31 // pred_fallthru
          _
        // Predicated region
        $region41: #{tpu_custom_call.1} parent=31 // pred_check
          %p232 = pneg %p108
        $region42: #{tpu_custom_call.1} parent=31 // pred_check_branch
          %234 = sbr.rel (%p232) target = $region44
        $region43: #{tpu_custom_call.1} parent=31 // pred_region
          %235 = dma.done [#allocation5], 16
        $region44: #{tpu_custom_call.1} parent=31 // pred_fallthru
          _
        %236 = sfence
        %s237 = sand.u32 %s46, 1
        %s238 = scalar_lea.sflag [#allocation3], %s237
        %s239 = sand.u32 %s46, 1
        %s240 = smul.addr %s239, 8
        %s241 = scalar_lea.vmem [#allocation2], %s240
        %p242 = pneg %p59
        %p243 = pneg %p56
        %s244 = sand.u32 %s74, 1
        %s245 = scalar_lea.sflag [#allocation7], %s244
        %s246 = sand.u32 %s74, 1
        %s247 = smul.addr %s246, 2
        %s248 = scalar_lea.vmem [#allocation6], %s247
        %p249 = pneg %p87
        %p250 = pneg %p84
        %p251 = pneg %p108
        %p252 = pneg %p105
        %p253 = pneg %p136
        %p254 = pneg %p133
        %s255 = sand.u32 %s123, 1
        %s256 = scalar_lea.sflag [#allocation4], %s255
        %s257 = sand.u32 %s123, 1
        %s258 = smul.addr %s257, 8
        %s259 = scalar_lea.vmem [#allocation9], %s258
        %s260 = sadd.s32 %s28, %s29
        %v261 = vld [vmem:[%s227] sm:$0x3]
        %v262 = vld [vmem:[%s218] sm:$0x3]
        %s263 = scalar_lea.vmem %s218, 2 [#allocation2]
        %v264 = vld [vmem:[%s263] sm:$0x3]
        %v265 = vmax.f32 %v262, %v264
        %s266 = scalar_lea.vmem %s218, 4 [#allocation2]
        %v267 = vld [vmem:[%s266] sm:$0x3]
        %v268 = vmax.f32 %v265, %v267
        %s269 = scalar_lea.vmem %s218, 6 [#allocation2]
        %v270 = vld [vmem:[%s269] sm:$0x3]
        %v271 = vmax.f32 %v268, %v270
        %v272 = vsub.f32 %v262, %v271
        %v273 = vmul.f32 %v272, 1.442695
        %v274 = vpow.pop %v273
        %v275 = vadd.f32 %v274, 0.0
        %vm276 = vcmp.eq.s32.totalorder %v261, 0
        %v277 = vsel %vm276, %v262, 0.0
        %s278 = sld [smem:[#allocation8]]
        %v279 = vstv %s278
        %v280 = vsel %vm276, %v279, 0.0
        %v281 = vsub.f32 %v264, %v271
        %v282 = vmul.f32 %v281, 1.442695
        %v283 = vpow.pop %v282
        %v284 = vadd.f32 %v275, %v283
        %vm285 = vcmp.eq.s32.totalorder %v261, 1
        %v286 = vsel %vm285, %v264, %v277
        %s287 = sld [smem:[#allocation8 + $0x1]]
        %v288 = vstv %s287
        %v289 = vsel %vm285, %v288, %v280
        %v290 = vsub.f32 %v267, %v271
        %v291 = vmul.f32 %v290, 1.442695
        %v292 = vpow.pop %v291
        %v293 = vadd.f32 %v284, %v292
        %vm294 = vcmp.eq.s32.totalorder %v261, 2
        %v295 = vsel %vm294, %v267, %v286
        %s296 = sld [smem:[#allocation8 + $0x2]]
        %v297 = vstv %s296
        %v298 = vsel %vm294, %v297, %v289
        %v299 = vsub.f32 %v270, %v271
        %v300 = vmul.f32 %v299, 1.442695
        %v301 = vpow.pop %v300
        %v302 = vadd.f32 %v293, %v301
        %vm303 = vcmp.eq.s32.totalorder %v261, 3
        %v304 = vsel %vm303, %v270, %v295
        %s305 = sld [smem:[#allocation8 + $0x3]]
        %v306 = vstv %s305
        %v307 = vsel %vm303, %v306, %v298
        %v308 = vlog2.pop %v302
        %v309 = vmul.f32 %v308, 0.6931472
        %v310 = vadd.f32 %v271, %v309
        %v311 = vlaneseq
        %v312 = vshrl.u32 %v311, 7
        %v313 = vlaneseq
        %v314 = vand.u32 %v313, 127
        %s315 = smul.u32 %s29, 256
        %v316 = vmul.u32 %v312, 128
        %v317 = vstv %s315
        %v318 = vadd.s32 %v317, %v316
        %v319 = vadd.s32 %v318, %v314
        %vm320 = vcmp.lt.s32.totalorder %v319, 256
        %v321 = vsel %vm320, %v307, 0.0
        %v322 = vsub.f32 %v310, %v304
        %v323 = vmul.f32 %v321, %v322
        %v324 = vsel %vm320, %v323, 0.0
        %vm325 = vcmask 1041408
        %v326 = vsel %vm325, %v324, 0.0
        %327 = vadd.xlane.f32.xlu0 %v326
        %v328 = vpop.xlane.xlu0 %327
        %v329 = vrot.slane %v328, 4
        %v330 = vadd.f32 %v328, %v329
        %v331 = vrot.slane %v330, 2
        %v332 = vadd.f32 %v330, %v331
        %v333 = vrot.slane %v332, 1
        %v334 = vadd.f32 %v332, %v333
        %s335 = vtos %v334
        %v336 = vsel %vm325, %v321, 0.0
        %337 = vadd.xlane.f32.xlu0 %v336
        %v338 = vpop.xlane.xlu0 %337
        %v339 = vrot.slane %v338, 4
        %v340 = vadd.f32 %v338, %v339
        %v341 = vrot.slane %v340, 2
        %v342 = vadd.f32 %v340, %v341
        %v343 = vrot.slane %v342, 1
        %v344 = vadd.f32 %v342, %v343
        %s345 = vtos %v344
        %vm346 = vcmp.eq.s32.totalorder %v312, 0
        %vm347 = vcmp.eq.s32.totalorder %v312, 1
        %v348 = vstv %s345
        %v349 = vsel %vm347, %v348, 0.0
        %v350 = vstv %s335
        %v351 = vsel %vm346, %v350, %v349
        %352 = vst [vmem:[%s259] sm:$0xff] %v351
        %s353 = sand.u32 %s123, 1
        %s354 = scalar_lea.sflag [#allocation4], %s353
        %s355 = sand.u32 %s123, 1
        %s356 = smul.addr %s355, 8
        %s357 = scalar_lea.vmem [#allocation9], %s356
        // Predicated region
        $region45: #{tpu_custom_call.1} parent=31 // pred_check
          %p358 = pneg %p133
        $region46: #{tpu_custom_call.1} parent=31 // pred_check_branch
          %360 = sbr.rel (%p358) target = $region48
        $region47: #{tpu_custom_call.1} parent=31 // pred_region
          %s361 = sadd.s32 %s28, %s29
          %s363 = ssub.s32 128, 128
          %364 = vsyncadd %s354, %s363
          %s365 = smul.addr %s361, 128
          %s366 = scalar_lea.hbm %s3, %s365
          %s368 = sshll.u32 %s357, 4
          %s369 = int_to_ptr.vmem [resolvable:$true] %s368
          %371 = dma.vmem_to_hbm [thread:$0]  %s369, 128, %s366, %s354
        $region48: #{tpu_custom_call.1} parent=31 // pred_fallthru
          _
      $region32: #{tpu_custom_call.1} parent=5 // pred_fallthru
        _
      %p372 = scmp.le.s32.totalorder 2, %s19
      // Predicated region
      $region49: #{tpu_custom_call.1} parent=5 // pred_check
        %p373 = pneg %p372
      $region50: #{tpu_custom_call.1} parent=5 // pred_check_branch
        %375 = sbr.rel (%p373) target = $region52
      $region51: #{tpu_custom_call.1} parent=5 // pred_region
        %s376 = ssub.s32 %s19, 2
        // Predicated region
        $region53: #{tpu_custom_call.1} parent=51 // pred_check
          %p377 = pneg %p139
        $region54: #{tpu_custom_call.1} parent=51 // pred_check_branch
          %379 = sbr.rel (%p377) target = $region56
        $region55: #{tpu_custom_call.1} parent=51 // pred_region
          %s380 = sand.u32 %s124, 1
          %s381 = scalar_lea.sflag [#allocation4], %s380
          %s382 = sand.u32 %s124, 1
          %s383 = smul.addr %s382, 8
          %s384 = scalar_lea.vmem [#allocation9], %s383
          %385 = dma.done %s381, 128
        $region56: #{tpu_custom_call.1} parent=51 // pred_fallthru
          _
      $region52: #{tpu_custom_call.1} parent=5 // pred_fallthru
        _
    $region6: #{tpu_custom_call.1} parent=1 // loop_footer
      %s23 = sadd.s32 1, %s19
    $region7: #{tpu_custom_call.1} parent=1 // loop_footer_branch
      %18 = sbr.rel target = $region3
    $region8: #{tpu_custom_call.1} parent=1 // loop_exit
      _
    %386 = vsyncpa [#allocation3], 1
    %s387 = scalar_lea.sflag [#allocation3], 1
    %388 = vsyncpa %s387, 1
    %389 = vsyncpa [#allocation7], 1
    %s390 = scalar_lea.sflag [#allocation7], 1
    %391 = vsyncpa %s390, 1
    %392 = vsyncpa [#allocation4], 1
    %s393 = scalar_lea.sflag [#allocation4], 1
    %394 = vsyncpa %s393, 1
    %395 = vsyncpa [#allocation5], 1
    %s396 = scalar_lea.sflag [#allocation5], 1
    %397 = vsyncpa %s396, 1

</llo_original>
